<compile_context>
chip_gen: v7x
topology: tpu7x:2x2x1
jax: 0.10.0
libtpu: 0.0.40
codegen_flags: <defaults>
</compile_context>

<pallas_src>
import jax
import jax.numpy as jnp
from jax.experimental import pallas as pl
from jax.experimental.pallas import tpu as pltpu

IN_FEATURES = 28 * 28        # 784
OUT_FEATURES = 200           # second_layer_size
PAD_FEATURES = 256           # lane-dense (multiple of 128) padded feature dim
BN_EPS = 1e-5


def net_kernel(x_ref, wt_ref, gamma_ref, beta_ref, o_ref):
    # x_ref:     [B, 784]   f32
    # wt_ref:    [784, 256] bf16  (pre-binarized W^T, zero-padded columns 200:256)
    # gamma_ref: [1, 256]   f32   (BN weight, zero-padded)
    # beta_ref:  [1, 256]   f32   (BN bias, zero-padded)
    # o_ref:     [B, 256]   f32
    x = x_ref[...]
    # bf16 +/-1 weights widen exactly to f32; accumulate in f32 on the MXU.
    w = wt_ref[...].astype(jnp.float32)
    y = jnp.dot(x, w, preferred_element_type=jnp.float32)          # [B, 256]

    # BatchNorm1d training-mode statistics: per-feature batch mean, biased variance.
    mean = jnp.mean(y, axis=0, keepdims=True)                      # [1, 256]
    diff = y - mean
    var = jnp.mean(diff * diff, axis=0, keepdims=True)             # [1, 256]

    # Fused BN + ReLU + Hardsigmoid:
    #   bn(y)  = y * scale + shift
    #   relu -> hardsigmoid(z) = clip(max(z,0)/6 + 0.5, 0, 1) == clip(z/6 + 0.5, 0.5, 1)
    scale = gamma_ref[...] * jax.lax.rsqrt(var + BN_EPS)           # [1, 256]
    shift = beta_ref[...] - mean * scale                           # [1, 256]
    a = scale * (1.0 / 6.0)
    b = shift * (1.0 / 6.0) + 0.5
    o_ref[...] = jnp.clip(y * a + b, 0.5, 1.0)


def net_forward(x_nchw, weight, bias, bn_gamma, bn_beta):
    """x_nchw: [B, 1, 28, 28] f32.  weight: [200, 784], bias: [200] (unused, see note).
    Returns [B, 200] f32, identical to the PyTorch forward in training mode."""
    del bias  # Cancelled exactly by the BatchNorm batch-mean subtraction.

    B = x_nchw.shape[0]
    x = x_nchw.reshape(B, IN_FEATURES).astype(jnp.float32)         # x.view(-1, 784)

    # --- parameter prep (in production, hoist this out of the per-step call) ---
    # BinarizeLinear: binarize weights with sign() (torch.sign convention: 0 -> 0).
    w_bin_t = jnp.sign(weight).T.astype(jnp.bfloat16)              # [784, 200], exact in bf16
    w_pad = jnp.zeros((IN_FEATURES, PAD_FEATURES), jnp.bfloat16)
    w_pad = w_pad.at[:, :OUT_FEATURES].set(w_bin_t)                # [784, 256]
    gamma = jnp.zeros((1, PAD_FEATURES), jnp.float32)
    gamma = gamma.at[:, :OUT_FEATURES].set(bn_gamma.astype(jnp.float32))
    beta = jnp.zeros((1, PAD_FEATURES), jnp.float32)
    beta = beta.at[:, :OUT_FEATURES].set(bn_beta.astype(jnp.float32))

    vmem = pltpu.MemorySpace.VMEM
    out_pad = pl.pallas_call(
        net_kernel,
        out_shape=jax.ShapeDtypeStruct((B, PAD_FEATURES), jnp.float32),
        in_specs=[
            pl.BlockSpec(memory_space=vmem),  # x           [B, 784]   f32
            pl.BlockSpec(memory_space=vmem),  # W^T (bin)   [784, 256] bf16
            pl.BlockSpec(memory_space=vmem),  # bn gamma    [1, 256]   f32
            pl.BlockSpec(memory_space=vmem),  # bn beta     [1, 256]   f32
        ],
        out_specs=pl.BlockSpec(memory_space=vmem),
    )(x, w_pad, gamma, beta)

    return out_pad[:, :OUT_FEATURES]


if __name__ == "__main__":
    key = jax.random.PRNGKey(0)
    k_x, k_w, k_b, k_g, k_be = jax.random.split(key, 5)

    B = 8
    x = jax.random.normal(k_x, (B, 1, 28, 28), dtype=jnp.float32)

    # Deterministic synthetic parameters (shapes from Net.__init__).
    weight = jax.random.normal(k_w, (OUT_FEATURES, IN_FEATURES), dtype=jnp.float32) * 0.05
    bias = jax.random.normal(k_b, (OUT_FEATURES,), dtype=jnp.float32) * 0.05
    bn_gamma = 1.0 + 0.1 * jax.random.normal(k_g, (OUT_FEATURES,), dtype=jnp.float32)
    bn_beta = 0.1 * jax.random.normal(k_be, (OUT_FEATURES,), dtype=jnp.float32)

    out = net_forward(x, weight, bias, bn_gamma, bn_beta)
    out = jax.block_until_ready(out)

    # Pure-JAX reference of the original (unfused, with bias) module math.
    xf = x.reshape(B, IN_FEATURES)
    y_ref = xf @ jnp.sign(weight).T + bias
    m = jnp.mean(y_ref, axis=0, keepdims=True)
    v = jnp.mean((y_ref - m) ** 2, axis=0, keepdims=True)
    y_ref = (y_ref - m) / jnp.sqrt(v + BN_EPS) * bn_gamma + bn_beta
    y_ref = jnp.clip((jnp.maximum(y_ref, 0.0) + 3.0) / 6.0, 0.0, 1.0)

    assert out.shape == (B, OUT_FEATURES)
    assert jnp.max(jnp.abs(out - y_ref)) < 1e-4

    print("KERNEL_OK")
</pallas_src>

<mosaic_0001>
module attributes {stable_mosaic.version = 11 : i64} {
  func.func @net_kernel(%arg0: memref<8x784xf32, #tpu.memory_space<vmem>>, %arg1: memref<784x256xbf16, #tpu.memory_space<vmem>>, %arg2: memref<1x256xf32, #tpu.memory_space<vmem>>, %arg3: memref<1x256xf32, #tpu.memory_space<vmem>>, %arg4: memref<8x256xf32, #tpu.memory_space<vmem>>) attributes {dimension_semantics = [], scalar_prefetch = 0 : i64, scratch_operands = 0 : i64, tpu.core_type = #tpu.core_type<tc>} {
    %c0 = arith.constant 0 : index
    %c0_0 = arith.constant 0 : index
    %0 = vector.load %arg0[%c0, %c0_0] : memref<8x784xf32, #tpu.memory_space<vmem>>, vector<8x784xf32>
    %c0_1 = arith.constant 0 : index
    %c0_2 = arith.constant 0 : index
    %1 = vector.load %arg1[%c0_1, %c0_2] : memref<784x256xbf16, #tpu.memory_space<vmem>>, vector<784x256xbf16>
    %2 = arith.extf %1 : vector<784x256xbf16> to vector<784x256xf32>
    %cst = arith.constant dense<0.000000e+00> : vector<8x256xf32>
    %3 = tpu.matmul %0, %2, %cst {dimension_numbers = #tpu.dot_dimension_numbers<[1], [0], [0], [1], [0, 0, 1, 1], [], []>} : vector<8x784xf32>, vector<784x256xf32>, vector<8x256xf32> -> vector<8x256xf32>
    %cst_3 = arith.constant dense<0.000000e+00> : vector<256xf32>
    %4 = vector.multi_reduction <add>, %3, %cst_3 [0] : vector<8x256xf32> to vector<256xf32>
    %5 = vector.shape_cast %4 : vector<256xf32> to vector<1x256xf32>
    %cst_4 = arith.constant 8.000000e+00 : f32
    %6 = vector.broadcast %cst_4 : f32 to vector<1x256xf32>
    %7 = arith.divf %5, %6 : vector<1x256xf32>
    %8 = vector.broadcast %7 : vector<1x256xf32> to vector<8x256xf32>
    %9 = arith.subf %3, %8 : vector<8x256xf32>
    %10 = arith.mulf %9, %9 : vector<8x256xf32>
    %cst_5 = arith.constant dense<0.000000e+00> : vector<256xf32>
    %11 = vector.multi_reduction <add>, %10, %cst_5 [0] : vector<8x256xf32> to vector<256xf32>
    %12 = vector.shape_cast %11 : vector<256xf32> to vector<1x256xf32>
    %cst_6 = arith.constant 8.000000e+00 : f32
    %13 = vector.broadcast %cst_6 : f32 to vector<1x256xf32>
    %14 = arith.divf %12, %13 : vector<1x256xf32>
    %c0_7 = arith.constant 0 : index
    %c0_8 = arith.constant 0 : index
    %15 = vector.load %arg2[%c0_7, %c0_8] : memref<1x256xf32, #tpu.memory_space<vmem>>, vector<1x256xf32>
    %cst_9 = arith.constant 9.99999974E-6 : f32
    %16 = vector.broadcast %cst_9 : f32 to vector<1x256xf32>
    %17 = arith.addf %14, %16 : vector<1x256xf32>
    %18 = math.rsqrt %17 : vector<1x256xf32>
    %19 = arith.mulf %15, %18 : vector<1x256xf32>
    %c0_10 = arith.constant 0 : index
    %c0_11 = arith.constant 0 : index
    %20 = vector.load %arg3[%c0_10, %c0_11] : memref<1x256xf32, #tpu.memory_space<vmem>>, vector<1x256xf32>
    %21 = arith.mulf %7, %19 : vector<1x256xf32>
    %22 = arith.subf %20, %21 : vector<1x256xf32>
    %cst_12 = arith.constant 0.166666672 : f32
    %23 = vector.broadcast %cst_12 : f32 to vector<1x256xf32>
    %24 = arith.mulf %19, %23 : vector<1x256xf32>
    %cst_13 = arith.constant 0.166666672 : f32
    %25 = vector.broadcast %cst_13 : f32 to vector<1x256xf32>
    %26 = arith.mulf %22, %25 : vector<1x256xf32>
    %cst_14 = arith.constant 5.000000e-01 : f32
    %27 = vector.broadcast %cst_14 : f32 to vector<1x256xf32>
    %28 = arith.addf %26, %27 : vector<1x256xf32>
    %29 = vector.broadcast %24 : vector<1x256xf32> to vector<8x256xf32>
    %30 = arith.mulf %3, %29 : vector<8x256xf32>
    %31 = vector.broadcast %28 : vector<1x256xf32> to vector<8x256xf32>
    %32 = arith.addf %30, %31 : vector<8x256xf32>
    %cst_15 = arith.constant 5.000000e-01 : f32
    %cst_16 = arith.constant 1.000000e+00 : f32
    %33 = vector.broadcast %cst_15 : f32 to vector<8x256xf32>
    %34 = arith.maximumf %33, %32 : vector<8x256xf32>
    %35 = vector.broadcast %cst_16 : f32 to vector<8x256xf32>
    %36 = arith.minimumf %35, %34 : vector<8x256xf32>
    %c0_17 = arith.constant 0 : index
    %c0_18 = arith.constant 0 : index
    %37 = vector.load %arg4[%c0_17, %c0_18] : memref<8x256xf32, #tpu.memory_space<vmem>>, vector<8x256xf32>
    tpu.vector_store %arg4[%c0_17, %c0_18], %36 {strides = array<i32>} : memref<8x256xf32, #tpu.memory_space<vmem>>, vector<8x256xf32>,
    return
  }
}

</mosaic_0001>

<llo_original>
// kernel: tpu_custom_call.1
$region0: #{tpu_custom_call.1}
  #allocation0 [shape = 'u32[]', space=smem, size = 0x4, offset = 0x4, fixed_abs, tag = 'smem constant byte address 0x4 - core index']
  #allocation1 [shape = 'u32[144,128]{1,0:T(1,128)}', space=vmem, size = 0x12000, scoped, tag = 'internal scratch']
  %s0 = inlined_call_operand.hbm [shape: f32[8,784], index: 0, kind: input, shape index: {}]
  %s1 = inlined_call_operand.hbm [shape: bf16[784,256], index: 1, kind: input, shape index: {}]
  %s2 = inlined_call_operand.vmem [shape: f32[1,256], index: 2, kind: input, shape index: {}]
  %s3 = inlined_call_operand.vmem [shape: f32[1,256], index: 3, kind: input, shape index: {}]
  %s4 = inlined_call_operand.hbm [shape: f32[8,256], index: 4, kind: output, shape index: {}]
  %s5 = sld [smem:[#allocation0]]
  $region34: #{tpu_custom_call.1} parent=0
    _
  %s7 = ssub.s32 1, %s5
  %s8 = scalar_select 0, %s7, %s5
  $region1: #{tpu_custom_call.1} parent=0
    #allocation2 [shape = 'u8[28672]{0}', space=vmem, size = 0x7000, scoped, tag = 'input window, operand 0, single buffered']
    #allocation3 [shape = 's32[1]{0}', space=sflag, size = 0x4, scoped, tag = 'scoped memory for tpu_custom_call.1']
    #allocation4 [shape = 's32[1]{0}', space=sflag, size = 0x4, scoped, tag = 'scoped memory for tpu_custom_call.1']
    #allocation5 [shape = 'u8[401408]{0}', space=vmem, size = 0x62000, scoped, tag = 'input window, operand 1, single buffered']
    #allocation6 [shape = 's32[1]{0}', space=sflag, size = 0x4, scoped, tag = 'scoped memory for tpu_custom_call.1']
    #allocation7 [shape = 'u8[8192]{0}', space=vmem, size = 0x2000, scoped, tag = 'output window, operand 0, single buffered']
    %9 = vsyncpa [#allocation3], 0
    %10 = vsyncpa [#allocation6], 0
    %11 = vsyncpa [#allocation4], 0
    // Predicated region
    $region2: #{tpu_custom_call.1} parent=1 // pred_check
      _
    $region3: #{tpu_custom_call.1} parent=1 // pred_check_branch
      %13 = sbr.rel (0) target = $region5
    $region4: #{tpu_custom_call.1} parent=1 // pred_region
      %s15 = ssub.s32 896, 896
      %16 = vsyncadd [#allocation3], %s15
      %s18 = sshll.u32 [#allocation2], 4
      %s19 = int_to_ptr.vmem [resolvable:$true] %s18
      %21 = dma.hbm_to_vmem [thread:$0]  %s0, 896, %s19, [#allocation3]
    $region5: #{tpu_custom_call.1} parent=1 // pred_fallthru
      _
    // Predicated region
    $region6: #{tpu_custom_call.1} parent=1 // pred_check
      _
    $region7: #{tpu_custom_call.1} parent=1 // pred_check_branch
      %23 = sbr.rel (0) target = $region9
    $region8: #{tpu_custom_call.1} parent=1 // pred_region
      %s25 = ssub.s32 12544, 12544
      %26 = vsyncadd [#allocation6], %s25
      %s27 = sshll.u32 [#allocation5], 4
      %s28 = int_to_ptr.vmem [resolvable:$true] %s27
      %33 = dma.hbm_to_vmem [thread:$0]  %s1, 12544, %s28, [#allocation6], 128, 128, 8
    $region9: #{tpu_custom_call.1} parent=1 // pred_fallthru
      _
    // Predicated region
    $region10: #{tpu_custom_call.1} parent=1 // pred_check
      _
    $region11: #{tpu_custom_call.1} parent=1 // pred_check_branch
      %35 = sbr.rel (0) target = $region13
    $region12: #{tpu_custom_call.1} parent=1 // pred_region
      _
    $region13: #{tpu_custom_call.1} parent=1 // pred_fallthru
      _
    // Predicated region
    $region14: #{tpu_custom_call.1} parent=1 // pred_check
      _
    $region15: #{tpu_custom_call.1} parent=1 // pred_check_branch
      %37 = sbr.rel (0) target = $region17
    $region16: #{tpu_custom_call.1} parent=1 // pred_region
      _
    $region17: #{tpu_custom_call.1} parent=1 // pred_fallthru
      _
    // Predicated region
    $region18: #{tpu_custom_call.1} parent=1 // pred_check
      _
    $region19: #{tpu_custom_call.1} parent=1 // pred_check_branch
      %39 = sbr.rel (0) target = $region21
    $region20: #{tpu_custom_call.1} parent=1 // pred_region
      %40 = dma.done [#allocation3], 896
    $region21: #{tpu_custom_call.1} parent=1 // pred_fallthru
      _
    // Predicated region
    $region22: #{tpu_custom_call.1} parent=1 // pred_check
      _
    $region23: #{tpu_custom_call.1} parent=1 // pred_check_branch
      %42 = sbr.rel (0) target = $region25
    $region24: #{tpu_custom_call.1} parent=1 // pred_region
      %43 = dma.done [#allocation6], 12544
    $region25: #{tpu_custom_call.1} parent=1 // pred_fallthru
      _
    %v44 = vld [vmem:[#allocation2] sm:$0xff]
    %v45 = vld [vmem:[#allocation2 + $0x8] sm:$0xff]
    %v46 = vld [vmem:[#allocation2 + $0x10] sm:$0xff]
    %v47 = vld [vmem:[#allocation2 + $0x18] sm:$0xff]
    %v48 = vld [vmem:[#allocation2 + $0x20] sm:$0xff]
    %v49 = vld [vmem:[#allocation2 + $0x28] sm:$0xff]
    %v50 = vld [vmem:[#allocation2 + $0x30] sm:$0xff]
    %v51 = vld [vmem:[#allocation5] sm:$0xff]
    %v52 = vld [vmem:[#allocation5 + $0x8] sm:$0xff]
    %v53 = vld [vmem:[#allocation5 + $0x10] sm:$0xff]
    %v54 = vld [vmem:[#allocation5 + $0x18] sm:$0xff]
    %v55 = vld [vmem:[#allocation5 + $0x20] sm:$0xff]
    %v56 = vld [vmem:[#allocation5 + $0x28] sm:$0xff]
    %v57 = vld [vmem:[#allocation5 + $0x30] sm:$0xff]
    %v58 = vld [vmem:[#allocation5 + $0x38] sm:$0xff]
    %v59 = vld [vmem:[#allocation5 + $0x40] sm:$0xff]
    %v60 = vld [vmem:[#allocation5 + $0x48] sm:$0xff]
    %v61 = vld [vmem:[#allocation5 + $0x50] sm:$0xff]
    %v62 = vld [vmem:[#allocation5 + $0x58] sm:$0xff]
    %v63 = vld [vmem:[#allocation5 + $0x60] sm:$0xff]
    %v64 = vld [vmem:[#allocation5 + $0x68] sm:$0xff]
    %v65 = vld [vmem:[#allocation5 + $0x70] sm:$0xff]
    %v66 = vld [vmem:[#allocation5 + $0x78] sm:$0xff]
    %v67 = vld [vmem:[#allocation5 + $0x80] sm:$0xff]
    %v68 = vld [vmem:[#allocation5 + $0x88] sm:$0xff]
    %v69 = vld [vmem:[#allocation5 + $0x90] sm:$0xff]
    %v70 = vld [vmem:[#allocation5 + $0x98] sm:$0xff]
    %v71 = vld [vmem:[#allocation5 + $0xa0] sm:$0xff]
    %v72 = vld [vmem:[#allocation5 + $0xa8] sm:$0xff]
    %v73 = vld [vmem:[#allocation5 + $0xb0] sm:$0xff]
    %v74 = vld [vmem:[#allocation5 + $0xb8] sm:$0xff]
    %v75 = vld [vmem:[#allocation5 + $0xc0] sm:$0xff]
    %v76 = vld [vmem:[#allocation5 + $0xc8] sm:$0xff]
    %v77 = vld [vmem:[#allocation5 + $0xd0] sm:$0xff]
    %v78 = vld [vmem:[#allocation5 + $0xd8] sm:$0xff]
    %v79 = vld [vmem:[#allocation5 + $0xe0] sm:$0xff]
    %v80 = vld [vmem:[#allocation5 + $0xe8] sm:$0xff]
    %v81 = vld [vmem:[#allocation5 + $0xf0] sm:$0xff]
    %v82 = vld [vmem:[#allocation5 + $0xf8] sm:$0xff]
    %v83 = vld [vmem:[#allocation5 + $0x100] sm:$0xff]
    %v84 = vld [vmem:[#allocation5 + $0x108] sm:$0xff]
    %v85 = vld [vmem:[#allocation5 + $0x110] sm:$0xff]
    %v86 = vld [vmem:[#allocation5 + $0x118] sm:$0xff]
    %v87 = vld [vmem:[#allocation5 + $0x120] sm:$0xff]
    %v88 = vld [vmem:[#allocation5 + $0x128] sm:$0xff]
    %v89 = vld [vmem:[#allocation5 + $0x130] sm:$0xff]
    %v90 = vld [vmem:[#allocation5 + $0x138] sm:$0xff]
    %v91 = vld [vmem:[#allocation5 + $0x140] sm:$0xff]
    %v92 = vld [vmem:[#allocation5 + $0x148] sm:$0xff]
    %v93 = vld [vmem:[#allocation5 + $0x150] sm:$0xff]
    %v94 = vld [vmem:[#allocation5 + $0x158] sm:$0xff]
    %v95 = vld [vmem:[#allocation5 + $0x160] sm:$0xff]
    %v96 = vld [vmem:[#allocation5 + $0x168] sm:$0xff]
    %v97 = vld [vmem:[#allocation5 + $0x170] sm:$0xff]
    %v98 = vld [vmem:[#allocation5 + $0x178] sm:$0xff]
    %v99 = vld [vmem:[#allocation5 + $0x180] sm:$0xff]
    %v100 = vld [vmem:[#allocation5 + $0x188] sm:$0xff]
    %v101 = vld [vmem:[#allocation5 + $0x190] sm:$0xff]
    %v102 = vld [vmem:[#allocation5 + $0x198] sm:$0xff]
    %v103 = vld [vmem:[#allocation5 + $0x1a0] sm:$0xff]
    %v104 = vld [vmem:[#allocation5 + $0x1a8] sm:$0xff]
    %v105 = vld [vmem:[#allocation5 + $0x1b0] sm:$0xff]
    %v106 = vld [vmem:[#allocation5 + $0x1b8] sm:$0xff]
    %v107 = vld [vmem:[#allocation5 + $0x1c0] sm:$0xff]
    %v108 = vld [vmem:[#allocation5 + $0x1c8] sm:$0xff]
    %v109 = vld [vmem:[#allocation5 + $0x1d0] sm:$0xff]
    %v110 = vld [vmem:[#allocation5 + $0x1d8] sm:$0xff]
    %v111 = vld [vmem:[#allocation5 + $0x1e0] sm:$0xff]
    %v112 = vld [vmem:[#allocation5 + $0x1e8] sm:$0xff]
    %v113 = vld [vmem:[#allocation5 + $0x1f0] sm:$0xff]
    %v114 = vld [vmem:[#allocation5 + $0x1f8] sm:$0xff]
    %v115 = vld [vmem:[#allocation5 + $0x200] sm:$0xff]
    %v116 = vld [vmem:[#allocation5 + $0x208] sm:$0xff]
    %v117 = vld [vmem:[#allocation5 + $0x210] sm:$0xff]
    %v118 = vld [vmem:[#allocation5 + $0x218] sm:$0xff]
    %v119 = vld [vmem:[#allocation5 + $0x220] sm:$0xff]
    %v120 = vld [vmem:[#allocation5 + $0x228] sm:$0xff]
    %v121 = vld [vmem:[#allocation5 + $0x230] sm:$0xff]
    %v122 = vld [vmem:[#allocation5 + $0x238] sm:$0xff]
    %v123 = vld [vmem:[#allocation5 + $0x240] sm:$0xff]
    %v124 = vld [vmem:[#allocation5 + $0x248] sm:$0xff]
    %v125 = vld [vmem:[#allocation5 + $0x250] sm:$0xff]
    %v126 = vld [vmem:[#allocation5 + $0x258] sm:$0xff]
    %v127 = vld [vmem:[#allocation5 + $0x260] sm:$0xff]
    %v128 = vld [vmem:[#allocation5 + $0x268] sm:$0xff]
    %v129 = vld [vmem:[#allocation5 + $0x270] sm:$0xff]
    %v130 = vld [vmem:[#allocation5 + $0x278] sm:$0xff]
    %v131 = vld [vmem:[#allocation5 + $0x280] sm:$0xff]
    %v132 = vld [vmem:[#allocation5 + $0x288] sm:$0xff]
    %v133 = vld [vmem:[#allocation5 + $0x290] sm:$0xff]
    %v134 = vld [vmem:[#allocation5 + $0x298] sm:$0xff]
    %v135 = vld [vmem:[#allocation5 + $0x2a0] sm:$0xff]
    %v136 = vld [vmem:[#allocation5 + $0x2a8] sm:$0xff]
    %v137 = vld [vmem:[#allocation5 + $0x2b0] sm:$0xff]
    %v138 = vld [vmem:[#allocation5 + $0x2b8] sm:$0xff]
    %v139 = vld [vmem:[#allocation5 + $0x2c0] sm:$0xff]
    %v140 = vld [vmem:[#allocation5 + $0x2c8] sm:$0xff]
    %v141 = vld [vmem:[#allocation5 + $0x2d0] sm:$0xff]
    %v142 = vld [vmem:[#allocation5 + $0x2d8] sm:$0xff]
    %v143 = vld [vmem:[#allocation5 + $0x2e0] sm:$0xff]
    %v144 = vld [vmem:[#allocation5 + $0x2e8] sm:$0xff]
    %v145 = vld [vmem:[#allocation5 + $0x2f0] sm:$0xff]
    %v146 = vld [vmem:[#allocation5 + $0x2f8] sm:$0xff]
    %v147 = vld [vmem:[#allocation5 + $0x300] sm:$0xff]
    %v148 = vld [vmem:[#allocation5 + $0x308] sm:$0xff]
    %v149 = vunpack.c.l.bf16 %v51
    %v150 = vunpack.c.h.bf16 %v51
    %v151 = vunpack.c.l.bf16 %v52
    %v152 = vunpack.c.h.bf16 %v52
    %v153 = vunpack.c.l.bf16 %v53
    %v154 = vunpack.c.h.bf16 %v53
    %v155 = vunpack.c.l.bf16 %v54
    %v156 = vunpack.c.h.bf16 %v54
    %v157 = vunpack.c.l.bf16 %v55
    %v158 = vunpack.c.h.bf16 %v55
    %v159 = vunpack.c.l.bf16 %v56
    %v160 = vunpack.c.h.bf16 %v56
    %v161 = vunpack.c.l.bf16 %v57
    %v162 = vunpack.c.h.bf16 %v57
    %v163 = vunpack.c.l.bf16 %v58
    %v164 = vunpack.c.h.bf16 %v58
    %v165 = vunpack.c.l.bf16 %v59
    %v166 = vunpack.c.h.bf16 %v59
    %v167 = vunpack.c.l.bf16 %v60
    %v168 = vunpack.c.h.bf16 %v60
    %v169 = vunpack.c.l.bf16 %v61
    %v170 = vunpack.c.h.bf16 %v61
    %v171 = vunpack.c.l.bf16 %v62
    %v172 = vunpack.c.h.bf16 %v62
    %v173 = vunpack.c.l.bf16 %v63
    %v174 = vunpack.c.h.bf16 %v63
    %v175 = vunpack.c.l.bf16 %v64
    %v176 = vunpack.c.h.bf16 %v64
    %v177 = vunpack.c.l.bf16 %v65
    %v178 = vunpack.c.h.bf16 %v65
    %v179 = vunpack.c.l.bf16 %v66
    %v180 = vunpack.c.h.bf16 %v66
    %v181 = vunpack.c.l.bf16 %v67
    %v182 = vunpack.c.h.bf16 %v67
    %v183 = vunpack.c.l.bf16 %v68
    %v184 = vunpack.c.h.bf16 %v68
    %v185 = vunpack.c.l.bf16 %v69
    %v186 = vunpack.c.h.bf16 %v69
    %v187 = vunpack.c.l.bf16 %v70
    %v188 = vunpack.c.h.bf16 %v70
    %v189 = vunpack.c.l.bf16 %v71
    %v190 = vunpack.c.h.bf16 %v71
    %v191 = vunpack.c.l.bf16 %v72
    %v192 = vunpack.c.h.bf16 %v72
    %v193 = vunpack.c.l.bf16 %v73
    %v194 = vunpack.c.h.bf16 %v73
    %v195 = vunpack.c.l.bf16 %v74
    %v196 = vunpack.c.h.bf16 %v74
    %v197 = vunpack.c.l.bf16 %v75
    %v198 = vunpack.c.h.bf16 %v75
    %v199 = vunpack.c.l.bf16 %v76
    %v200 = vunpack.c.h.bf16 %v76
    %v201 = vunpack.c.l.bf16 %v77
    %v202 = vunpack.c.h.bf16 %v77
    %v203 = vunpack.c.l.bf16 %v78
    %v204 = vunpack.c.h.bf16 %v78
    %v205 = vunpack.c.l.bf16 %v79
    %v206 = vunpack.c.h.bf16 %v79
    %v207 = vunpack.c.l.bf16 %v80
    %v208 = vunpack.c.h.bf16 %v80
    %v209 = vunpack.c.l.bf16 %v81
    %v210 = vunpack.c.h.bf16 %v81
    %v211 = vunpack.c.l.bf16 %v82
    %v212 = vunpack.c.h.bf16 %v82
    %v213 = vunpack.c.l.bf16 %v83
    %v214 = vunpack.c.h.bf16 %v83
    %v215 = vunpack.c.l.bf16 %v84
    %v216 = vunpack.c.h.bf16 %v84
    %v217 = vunpack.c.l.bf16 %v85
    %v218 = vunpack.c.h.bf16 %v85
    %v219 = vunpack.c.l.bf16 %v86
    %v220 = vunpack.c.h.bf16 %v86
    %v221 = vunpack.c.l.bf16 %v87
    %v222 = vunpack.c.h.bf16 %v87
    %v223 = vunpack.c.l.bf16 %v88
    %v224 = vunpack.c.h.bf16 %v88
    %v225 = vunpack.c.l.bf16 %v89
    %v226 = vunpack.c.h.bf16 %v89
    %v227 = vunpack.c.l.bf16 %v90
    %v228 = vunpack.c.h.bf16 %v90
    %v229 = vunpack.c.l.bf16 %v91
    %v230 = vunpack.c.h.bf16 %v91
    %v231 = vunpack.c.l.bf16 %v92
    %v232 = vunpack.c.h.bf16 %v92
    %v233 = vunpack.c.l.bf16 %v93
    %v234 = vunpack.c.h.bf16 %v93
    %v235 = vunpack.c.l.bf16 %v94
    %v236 = vunpack.c.h.bf16 %v94
    %v237 = vunpack.c.l.bf16 %v95
    %v238 = vunpack.c.h.bf16 %v95
    %v239 = vunpack.c.l.bf16 %v96
    %v240 = vunpack.c.h.bf16 %v96
    %v241 = vunpack.c.l.bf16 %v97
    %v242 = vunpack.c.h.bf16 %v97
    %v243 = vunpack.c.l.bf16 %v98
    %v244 = vunpack.c.h.bf16 %v98
    %v245 = vunpack.c.l.bf16 %v99
    %v246 = vunpack.c.h.bf16 %v99
    %v247 = vunpack.c.l.bf16 %v100
    %v248 = vunpack.c.h.bf16 %v100
    %v249 = vunpack.c.l.bf16 %v101
    %v250 = vunpack.c.h.bf16 %v101
    %v251 = vunpack.c.l.bf16 %v102
    %v252 = vunpack.c.h.bf16 %v102
    %v253 = vunpack.c.l.bf16 %v103
    %v254 = vunpack.c.h.bf16 %v103
    %v255 = vunpack.c.l.bf16 %v104
    %v256 = vunpack.c.h.bf16 %v104
    %v257 = vunpack.c.l.bf16 %v105
    %v258 = vunpack.c.h.bf16 %v105
    %v259 = vunpack.c.l.bf16 %v106
    %v260 = vunpack.c.h.bf16 %v106
    %v261 = vunpack.c.l.bf16 %v107
    %v262 = vunpack.c.h.bf16 %v107
    %v263 = vunpack.c.l.bf16 %v108
    %v264 = vunpack.c.h.bf16 %v108
    %v265 = vunpack.c.l.bf16 %v109
    %v266 = vunpack.c.h.bf16 %v109
    %v267 = vunpack.c.l.bf16 %v110
    %v268 = vunpack.c.h.bf16 %v110
    %v269 = vunpack.c.l.bf16 %v111
    %v270 = vunpack.c.h.bf16 %v111
    %v271 = vunpack.c.l.bf16 %v112
    %v272 = vunpack.c.h.bf16 %v112
    %v273 = vunpack.c.l.bf16 %v113
    %v274 = vunpack.c.h.bf16 %v113
    %v275 = vunpack.c.l.bf16 %v114
    %v276 = vunpack.c.h.bf16 %v114
    %v277 = vunpack.c.l.bf16 %v115
    %v278 = vunpack.c.h.bf16 %v115
    %v279 = vunpack.c.l.bf16 %v116
    %v280 = vunpack.c.h.bf16 %v116
    %v281 = vunpack.c.l.bf16 %v117
    %v282 = vunpack.c.h.bf16 %v117
    %v283 = vunpack.c.l.bf16 %v118
    %v284 = vunpack.c.h.bf16 %v118
    %v285 = vunpack.c.l.bf16 %v119
    %v286 = vunpack.c.h.bf16 %v119
    %v287 = vunpack.c.l.bf16 %v120
    %v288 = vunpack.c.h.bf16 %v120
    %v289 = vunpack.c.l.bf16 %v121
    %v290 = vunpack.c.h.bf16 %v121
    %v291 = vunpack.c.l.bf16 %v122
    %v292 = vunpack.c.h.bf16 %v122
    %v293 = vunpack.c.l.bf16 %v123
    %v294 = vunpack.c.h.bf16 %v123
    %v295 = vunpack.c.l.bf16 %v124
    %v296 = vunpack.c.h.bf16 %v124
    %v297 = vunpack.c.l.bf16 %v125
    %v298 = vunpack.c.h.bf16 %v125
    %v299 = vunpack.c.l.bf16 %v126
    %v300 = vunpack.c.h.bf16 %v126
    %v301 = vunpack.c.l.bf16 %v127
    %v302 = vunpack.c.h.bf16 %v127
    %v303 = vunpack.c.l.bf16 %v128
    %v304 = vunpack.c.h.bf16 %v128
    %v305 = vunpack.c.l.bf16 %v129
    %v306 = vunpack.c.h.bf16 %v129
    %v307 = vunpack.c.l.bf16 %v130
    %v308 = vunpack.c.h.bf16 %v130
    %v309 = vunpack.c.l.bf16 %v131
    %v310 = vunpack.c.h.bf16 %v131
    %v311 = vunpack.c.l.bf16 %v132
    %v312 = vunpack.c.h.bf16 %v132
    %v313 = vunpack.c.l.bf16 %v133
    %v314 = vunpack.c.h.bf16 %v133
    %v315 = vunpack.c.l.bf16 %v134
    %v316 = vunpack.c.h.bf16 %v134
    %v317 = vunpack.c.l.bf16 %v135
    %v318 = vunpack.c.h.bf16 %v135
    %v319 = vunpack.c.l.bf16 %v136
    %v320 = vunpack.c.h.bf16 %v136
    %v321 = vunpack.c.l.bf16 %v137
    %v322 = vunpack.c.h.bf16 %v137
    %v323 = vunpack.c.l.bf16 %v138
    %v324 = vunpack.c.h.bf16 %v138
    %v325 = vunpack.c.l.bf16 %v139
    %v326 = vunpack.c.h.bf16 %v139
    %v327 = vunpack.c.l.bf16 %v140
    %v328 = vunpack.c.h.bf16 %v140
    %v329 = vunpack.c.l.bf16 %v141
    %v330 = vunpack.c.h.bf16 %v141
    %v331 = vunpack.c.l.bf16 %v142
    %v332 = vunpack.c.h.bf16 %v142
    %v333 = vunpack.c.l.bf16 %v143
    %v334 = vunpack.c.h.bf16 %v143
    %v335 = vunpack.c.l.bf16 %v144
    %v336 = vunpack.c.h.bf16 %v144
    %v337 = vunpack.c.l.bf16 %v145
    %v338 = vunpack.c.h.bf16 %v145
    %v339 = vunpack.c.l.bf16 %v146
    %v340 = vunpack.c.h.bf16 %v146
    %v341 = vunpack.c.l.bf16 %v147
    %v342 = vunpack.c.h.bf16 %v147
    %v343 = vunpack.c.l.bf16 %v148
    %v344 = vunpack.c.h.bf16 %v148
    %vm345 = vcmask 130048
    %v347 = vsel %vm345, %v50, 0
    %349 = vmatprep.subr.mxu0 %v150
    %350 = vmatpush1.msra.mxu0 %v149
    %351 = vmatprep.subr.mxu0 %v152
    %352 = vmatpush1.msra.mxu0 %v151
    %353 = vmatprep.subr.mxu0 %v154
    %354 = vmatpush1.msra.mxu0 %v153
    %355 = vmatprep.subr.mxu0 %v156
    %356 = vmatpush1.msra.mxu0 %v155
    %357 = vmatprep.subr.mxu0 %v158
    %358 = vmatpush1.msra.mxu0 %v157
    %359 = vmatprep.subr.mxu0 %v160
    %360 = vmatpush1.msra.mxu0 %v159
    %361 = vmatprep.subr.mxu0 %v162
    %362 = vmatpush1.msra.mxu0 %v161
    %363 = vmatprep.subr.mxu0 %v164
    %364 = vmatpush1.msra.mxu0 %v163
    %365 = vmatprep.subr.mxu0 %v166
    %366 = vmatpush1.msra.mxu0 %v165
    %367 = vmatprep.subr.mxu0 %v168
    %368 = vmatpush1.msra.mxu0 %v167
    %369 = vmatprep.subr.mxu0 %v170
    %370 = vmatpush1.msra.mxu0 %v169
    %371 = vmatprep.subr.mxu0 %v172
    %372 = vmatpush1.msra.mxu0 %v171
    %373 = vmatprep.subr.mxu0 %v174
    %374 = vmatpush1.msra.mxu0 %v173
    %375 = vmatprep.subr.mxu0 %v176
    %376 = vmatpush1.msra.mxu0 %v175
    %377 = vmatprep.subr.mxu0 %v178
    %378 = vmatpush1.msra.mxu0 %v177
    %379 = vmatprep.subr.mxu0 %v180
    %380 = vmatpush1.msra.mxu0 %v179
    %381 = vmatprep.subr.mxu0 %v182
    %382 = vmatpush1.msra.mxu0 %v181
    %383 = vmatprep.subr.mxu0 %v184
    %384 = vmatpush1.msra.mxu0 %v183
    %385 = vmatprep.subr.mxu0 %v186
    %386 = vmatpush1.msra.mxu0 %v185
    %387 = vmatprep.subr.mxu0 %v188
    %388 = vmatpush1.msra.mxu0 %v187
    %389 = vmatprep.subr.mxu0 %v190
    %390 = vmatpush1.msra.mxu0 %v189
    %391 = vmatprep.subr.mxu0 %v192
    %392 = vmatpush1.msra.mxu0 %v191
    %393 = vmatprep.subr.mxu0 %v194
    %394 = vmatpush1.msra.mxu0 %v193
    %395 = vmatprep.subr.mxu0 %v196
    %396 = vmatpush1.msra.mxu0 %v195
    %397 = vmatprep.subr.mxu0 %v198
    %398 = vmatpush1.msra.mxu0 %v197
    %399 = vmatprep.subr.mxu0 %v200
    %400 = vmatpush1.msra.mxu0 %v199
    %401 = vmatprep.subr.mxu0 %v202
    %402 = vmatpush1.msra.mxu0 %v201
    %403 = vmatprep.subr.mxu0 %v204
    %404 = vmatpush1.msra.mxu0 %v203
    %405 = vmatprep.subr.mxu0 %v206
    %406 = vmatpush1.msra.mxu0 %v205
    %407 = vmatprep.subr.mxu0 %v208
    %408 = vmatpush1.msra.mxu0 %v207
    %409 = vmatprep.subr.mxu0 %v210
    %410 = vmatpush1.msra.mxu0 %v209
    %411 = vmatprep.subr.mxu0 %v212
    %412 = vmatpush1.msra.mxu0 %v211
    %413 = vmatprep.mubr.f32.mxu0 %v45
    %414 = vmatmul.mubr.f32.gmra.mrb[0].mxu0 %v44
    %v415 = vpop.f32.mrb[0].mxu0
    %v416 = vadd.f32 0.0, %v415
    %v417 = vpop.f32.mrb[0].mxu0
    %v418 = vadd.f32 0.0, %v417
    %419 = vdwg.mxu0
    %420 = vmatprep.subr.mxu0 %v214
    %421 = vmatpush1.msra.mxu0 %v213
    %422 = vmatprep.subr.mxu0 %v216
    %423 = vmatpush1.msra.mxu0 %v215
    %424 = vmatprep.subr.mxu0 %v218
    %425 = vmatpush1.msra.mxu0 %v217
    %426 = vmatprep.subr.mxu0 %v220
    %427 = vmatpush1.msra.mxu0 %v219
    %428 = vmatprep.subr.mxu0 %v222
    %429 = vmatpush1.msra.mxu0 %v221
    %430 = vmatprep.subr.mxu0 %v224
    %431 = vmatpush1.msra.mxu0 %v223
    %432 = vmatprep.subr.mxu0 %v226
    %433 = vmatpush1.msra.mxu0 %v225
    %434 = vmatprep.subr.mxu0 %v228
    %435 = vmatpush1.msra.mxu0 %v227
    %436 = vmatprep.subr.mxu0 %v230
    %437 = vmatpush1.msra.mxu0 %v229
    %438 = vmatprep.subr.mxu0 %v232
    %439 = vmatpush1.msra.mxu0 %v231
    %440 = vmatprep.subr.mxu0 %v234
    %441 = vmatpush1.msra.mxu0 %v233
    %442 = vmatprep.subr.mxu0 %v236
    %443 = vmatpush1.msra.mxu0 %v235
    %444 = vmatprep.subr.mxu0 %v238
    %445 = vmatpush1.msra.mxu0 %v237
    %446 = vmatprep.subr.mxu0 %v240
    %447 = vmatpush1.msra.mxu0 %v239
    %448 = vmatprep.subr.mxu0 %v242
    %449 = vmatpush1.msra.mxu0 %v241
    %450 = vmatprep.subr.mxu0 %v244
    %451 = vmatpush1.msra.mxu0 %v243
    %452 = vmatprep.subr.mxu0 %v246
    %453 = vmatpush1.msra.mxu0 %v245
    %454 = vmatprep.subr.mxu0 %v248
    %455 = vmatpush1.msra.mxu0 %v247
    %456 = vmatprep.subr.mxu0 %v250
    %457 = vmatpush1.msra.mxu0 %v249
    %458 = vmatprep.subr.mxu0 %v252
    %459 = vmatpush1.msra.mxu0 %v251
    %460 = vmatprep.subr.mxu0 %v254
    %461 = vmatpush1.msra.mxu0 %v253
    %462 = vmatprep.subr.mxu0 %v256
    %463 = vmatpush1.msra.mxu0 %v255
    %464 = vmatprep.subr.mxu0 %v258
    %465 = vmatpush1.msra.mxu0 %v257
    %466 = vmatprep.subr.mxu0 %v260
    %467 = vmatpush1.msra.mxu0 %v259
    %468 = vmatprep.subr.mxu0 %v262
    %469 = vmatpush1.msra.mxu0 %v261
    %470 = vmatprep.subr.mxu0 %v264
    %471 = vmatpush1.msra.mxu0 %v263
    %472 = vmatprep.subr.mxu0 %v266
    %473 = vmatpush1.msra.mxu0 %v265
    %474 = vmatprep.subr.mxu0 %v268
    %475 = vmatpush1.msra.mxu0 %v267
    %476 = vmatprep.subr.mxu0 %v270
    %477 = vmatpush1.msra.mxu0 %v269
    %478 = vmatprep.subr.mxu0 %v272
    %479 = vmatpush1.msra.mxu0 %v271
    %480 = vmatprep.subr.mxu0 %v274
    %481 = vmatpush1.msra.mxu0 %v273
    %482 = vmatprep.subr.mxu0 %v276
    %483 = vmatpush1.msra.mxu0 %v275
    %484 = vmatprep.mubr.f32.mxu0 %v47
    %485 = vmatmul.mubr.f32.gmra.mrb[0].mxu0 %v46
    %v486 = vpop.f32.mrb[0].mxu0
    %v487 = vadd.f32 %v416, %v486
    %v488 = vpop.f32.mrb[0].mxu0
    %v489 = vadd.f32 %v418, %v488
    %490 = vdwg.mxu0
    %491 = vmatprep.subr.mxu0 %v278
    %492 = vmatpush1.msra.mxu0 %v277
    %493 = vmatprep.subr.mxu0 %v280
    %494 = vmatpush1.msra.mxu0 %v279
    %495 = vmatprep.subr.mxu0 %v282
    %496 = vmatpush1.msra.mxu0 %v281
    %497 = vmatprep.subr.mxu0 %v284
    %498 = vmatpush1.msra.mxu0 %v283
    %499 = vmatprep.subr.mxu0 %v286
    %500 = vmatpush1.msra.mxu0 %v285
    %501 = vmatprep.subr.mxu0 %v288
    %502 = vmatpush1.msra.mxu0 %v287
    %503 = vmatprep.subr.mxu0 %v290
    %504 = vmatpush1.msra.mxu0 %v289
    %505 = vmatprep.subr.mxu0 %v292
    %506 = vmatpush1.msra.mxu0 %v291
    %507 = vmatprep.subr.mxu0 %v294
    %508 = vmatpush1.msra.mxu0 %v293
    %509 = vmatprep.subr.mxu0 %v296
    %510 = vmatpush1.msra.mxu0 %v295
    %511 = vmatprep.subr.mxu0 %v298
    %512 = vmatpush1.msra.mxu0 %v297
    %513 = vmatprep.subr.mxu0 %v300
    %514 = vmatpush1.msra.mxu0 %v299
    %515 = vmatprep.subr.mxu0 %v302
    %516 = vmatpush1.msra.mxu0 %v301
    %517 = vmatprep.subr.mxu0 %v304
    %518 = vmatpush1.msra.mxu0 %v303
    %519 = vmatprep.subr.mxu0 %v306
    %520 = vmatpush1.msra.mxu0 %v305
    %521 = vmatprep.subr.mxu0 %v308
    %522 = vmatpush1.msra.mxu0 %v307
    %523 = vmatprep.subr.mxu0 %v310
    %524 = vmatpush1.msra.mxu0 %v309
    %525 = vmatprep.subr.mxu0 %v312
    %526 = vmatpush1.msra.mxu0 %v311
    %527 = vmatprep.subr.mxu0 %v314
    %528 = vmatpush1.msra.mxu0 %v313
    %529 = vmatprep.subr.mxu0 %v316
    %530 = vmatpush1.msra.mxu0 %v315
    %531 = vmatprep.subr.mxu0 %v318
    %532 = vmatpush1.msra.mxu0 %v317
    %533 = vmatprep.subr.mxu0 %v320
    %534 = vmatpush1.msra.mxu0 %v319
    %535 = vmatprep.subr.mxu0 %v322
    %536 = vmatpush1.msra.mxu0 %v321
    %537 = vmatprep.subr.mxu0 %v324
    %538 = vmatpush1.msra.mxu0 %v323
    %539 = vmatprep.subr.mxu0 %v326
    %540 = vmatpush1.msra.mxu0 %v325
    %541 = vmatprep.subr.mxu0 %v328
    %542 = vmatpush1.msra.mxu0 %v327
    %543 = vmatprep.subr.mxu0 %v330
    %544 = vmatpush1.msra.mxu0 %v329
    %545 = vmatprep.subr.mxu0 %v332
    %546 = vmatpush1.msra.mxu0 %v331
    %547 = vmatprep.subr.mxu0 %v334
    %548 = vmatpush1.msra.mxu0 %v333
    %549 = vmatprep.subr.mxu0 %v336
    %550 = vmatpush1.msra.mxu0 %v335
    %551 = vmatprep.subr.mxu0 %v338
    %552 = vmatpush1.msra.mxu0 %v337
    %553 = vmatprep.subr.mxu0 %v340
    %554 = vmatpush1.msra.mxu0 %v339
    %555 = vmatprep.mubr.f32.mxu0 %v49
    %556 = vmatmul.mubr.f32.gmra.mrb[0].mxu0 %v48
    %v557 = vpop.f32.mrb[0].mxu0
    %v558 = vadd.f32 %v487, %v557
    %v559 = vpop.f32.mrb[0].mxu0
    %v560 = vadd.f32 %v489, %v559
    %561 = vdwg.mxu0
    %562 = vmatprep.subr.mxu0 %v342
    %563 = vmatpush1.msra.mxu0 %v341
    %564 = vmatprep.subr.mxu0 %v344
    %565 = vmatpush1.msra.mxu0 %v343
    %566 = vmatprep.subr.mxu0 0.0
    %567 = vmatpush1.msra.mxu0 0.0
    %568 = vmatprep.subr.mxu0 0.0
    %569 = vmatpush1.msra.mxu0 0.0
    %570 = vmatprep.subr.mxu0 0.0
    %571 = vmatpush1.msra.mxu0 0.0
    %572 = vmatprep.subr.mxu0 0.0
    %573 = vmatpush1.msra.mxu0 0.0
    %574 = vmatprep.subr.mxu0 0.0
    %575 = vmatpush1.msra.mxu0 0.0
    %576 = vmatprep.subr.mxu0 0.0
    %577 = vmatpush1.msra.mxu0 0.0
    %578 = vmatprep.subr.mxu0 0.0
    %579 = vmatpush1.msra.mxu0 0.0
    %580 = vmatprep.subr.mxu0 0.0
    %581 = vmatpush1.msra.mxu0 0.0
    %582 = vmatprep.subr.mxu0 0.0
    %583 = vmatpush1.msra.mxu0 0.0
    %584 = vmatprep.subr.mxu0 0.0
    %585 = vmatpush1.msra.mxu0 0.0
    %586 = vmatprep.subr.mxu0 0.0
    %587 = vmatpush1.msra.mxu0 0.0
    %588 = vmatprep.subr.mxu0 0.0
    %589 = vmatpush1.msra.mxu0 0.0
    %590 = vmatprep.subr.mxu0 0.0
    %591 = vmatpush1.msra.mxu0 0.0
    %592 = vmatprep.subr.mxu0 0.0
    %593 = vmatpush1.msra.mxu0 0.0
    %594 = vmatprep.subr.mxu0 0.0
    %595 = vmatpush1.msra.mxu0 0.0
    %596 = vmatprep.subr.mxu0 0.0
    %597 = vmatpush1.msra.mxu0 0.0
    %598 = vmatprep.subr.mxu0 0.0
    %599 = vmatpush1.msra.mxu0 0.0
    %600 = vmatprep.subr.mxu0 0.0
    %601 = vmatpush1.msra.mxu0 0.0
    %602 = vmatprep.subr.mxu0 0.0
    %603 = vmatpush1.msra.mxu0 0.0
    %604 = vmatprep.subr.mxu0 0.0
    %605 = vmatpush1.msra.mxu0 0.0
    %606 = vmatprep.subr.mxu0 0.0
    %607 = vmatpush1.msra.mxu0 0.0
    %608 = vmatprep.subr.mxu0 0.0
    %609 = vmatpush1.msra.mxu0 0.0
    %610 = vmatprep.subr.mxu0 0.0
    %611 = vmatpush1.msra.mxu0 0.0
    %612 = vmatprep.subr.mxu0 0.0
    %613 = vmatpush1.msra.mxu0 0.0
    %614 = vmatprep.subr.mxu0 0.0
    %615 = vmatpush1.msra.mxu0 0.0
    %616 = vmatprep.subr.mxu0 0.0
    %617 = vmatpush1.msra.mxu0 0.0
    %618 = vmatprep.subr.mxu0 0.0
    %619 = vmatpush1.msra.mxu0 0.0
    %620 = vmatprep.subr.mxu0 0.0
    %621 = vmatpush1.msra.mxu0 0.0
    %622 = vmatprep.subr.mxu0 0.0
    %623 = vmatpush1.msra.mxu0 0.0
    %624 = vmatprep.subr.mxu0 0.0
    %625 = vmatpush1.msra.mxu0 0.0
    %626 = vmatprep.mubr.f32.mxu0 0.0
    %627 = vmatmul.mubr.f32.gmra.mrb[0].mxu0 %v347
    %v628 = vpop.f32.mrb[0].mxu0
    %v629 = vadd.f32 %v558, %v628
    %v630 = vpop.f32.mrb[0].mxu0
    %v631 = vadd.f32 %v560, %v630
    %632 = vdwg.mxu0
    %v633 = vrot.slane %v629, 4
    %v634 = vadd.f32 %v629, %v633
    %v635 = vrot.slane %v634, 2
    %v636 = vadd.f32 %v634, %v635
    %v637 = vrot.slane %v636, 1
    %v638 = vadd.f32 %v636, %v637
    %v639 = vrot.slane %v631, 4
    %v640 = vadd.f32 %v631, %v639
    %v641 = vrot.slane %v640, 2
    %v642 = vadd.f32 %v640, %v641
    %v643 = vrot.slane %v642, 1
    %v644 = vadd.f32 %v642, %v643
    %v645 = vrcp.pop 8.0
    %v646 = vmul.f32 %v638, %v645
    %v647 = vmul.f32 %v644, %v645
    %v648 = vsub.f32 %v629, %v646
    %v649 = vsub.f32 %v631, %v647
    %v650 = vmul.f32 %v648, %v648
    %v651 = vmul.f32 %v649, %v649
    %v652 = vrot.slane %v650, 4
    %v653 = vadd.f32 %v650, %v652
    %v654 = vrot.slane %v653, 2
    %v655 = vadd.f32 %v653, %v654
    %v656 = vrot.slane %v655, 1
    %v657 = vadd.f32 %v655, %v656
    %v658 = vrot.slane %v651, 4
    %v659 = vadd.f32 %v651, %v658
    %v660 = vrot.slane %v659, 2
    %v661 = vadd.f32 %v659, %v660
    %v662 = vrot.slane %v661, 1
    %v663 = vadd.f32 %v661, %v662
    %v664 = vmul.f32 %v657, %v645
    %v665 = vmul.f32 %v663, %v645
    %v666 = vld [vmem:[%s2] sm:$0x3]
    %v667 = vadd.f32 %v664, 1e-05
    %v668 = vadd.f32 %v665, 1e-05
    %v669 = vrsqrt.pop %v667
    %v670 = vrsqrt.pop %v668
    %v673 = vcombine.low %v669, %v670
    %v675 = vunpack.c.l.s4 1966171168
    %v676 = vunpack.c.0.s8 %v675
    %v677 = vlaneseq
    %v678 = vshrl.u32 %v677, 7
    %v679 = vsub.s32 %v676, %v678
    %v680 = vrot.slane %v673, %v679
    %v682 = vunpack.c.l.s4 1966171168
    %v683 = vunpack.c.0.s8 %v682
    %v684 = vlaneseq
    %v685 = vshrl.u32 %v684, 7
    %v686 = vsub.s32 %v683, %v685
    %v687 = vrot.slane %v680, %v686
    %v689 = vmul.f32 %v666, %v687
    %v690 = vld [vmem:[%s3] sm:$0x3]
    %v692 = vlaneseq
    %v693 = vshrl.u32 %v692, 7
    %v694 = vsub.s32 0, %v693
    %v695 = vrot.slane %v689, %v694
    %v696 = vlaneseq
    %v697 = vshrl.u32 %v696, 7
    %v698 = vsub.s32 1, %v697
    %v699 = vrot.slane %v689, %v698
    %v702 = vmul.f32 %v646, %v695
    %v703 = vmul.f32 %v647, %v699
    %v706 = vcombine.low %v702, %v703
    %v708 = vunpack.c.l.s4 1966171168
    %v709 = vunpack.c.0.s8 %v708
    %v710 = vlaneseq
    %v711 = vshrl.u32 %v710, 7
    %v712 = vsub.s32 %v709, %v711
    %v713 = vrot.slane %v706, %v712
    %v715 = vunpack.c.l.s4 1966171168
    %v716 = vunpack.c.0.s8 %v715
    %v717 = vlaneseq
    %v718 = vshrl.u32 %v717, 7
    %v719 = vsub.s32 %v716, %v718
    %v720 = vrot.slane %v713, %v719
    %v722 = vsub.f32 %v690, %v720
    %v723 = vmul.f32 %v689, 0.16666667
    %v724 = vmul.f32 %v722, 0.16666667
    %v725 = vadd.f32 %v724, 0.5
    %v727 = vlaneseq
    %v728 = vshrl.u32 %v727, 7
    %v729 = vsub.s32 0, %v728
    %v730 = vrot.slane %v723, %v729
    %v731 = vlaneseq
    %v732 = vshrl.u32 %v731, 7
    %v733 = vsub.s32 1, %v732
    %v734 = vrot.slane %v723, %v733
    %v737 = vmul.f32 %v629, %v730
    %v738 = vmul.f32 %v631, %v734
    %v740 = vlaneseq
    %v741 = vshrl.u32 %v740, 7
    %v742 = vsub.s32 0, %v741
    %v743 = vrot.slane %v725, %v742
    %v744 = vlaneseq
    %v745 = vshrl.u32 %v744, 7
    %v746 = vsub.s32 1, %v745
    %v747 = vrot.slane %v725, %v746
    %v750 = vadd.f32 %v737, %v743
    %v751 = vadd.f32 %v738, %v747
    %v752 = vmax.f32 %v750, 0.5
    %v753 = vmax.f32 %v751, 0.5
    %v754 = vmin.f32 %v752, 1.0
    %v755 = vmin.f32 %v753, 1.0
    %756 = vst [vmem:[#allocation7] sm:$0xff] %v754
    %757 = vst [vmem:[#allocation7 + $0x8] sm:$0xff] %v755
    // Predicated region
    $region26: #{tpu_custom_call.1} parent=1 // pred_check
      _
    $region27: #{tpu_custom_call.1} parent=1 // pred_check_branch
      %759 = sbr.rel (0) target = $region29
    $region28: #{tpu_custom_call.1} parent=1 // pred_region
      %s761 = ssub.s32 256, 256
      %762 = vsyncadd [#allocation4], %s761
      %s764 = sshll.u32 [#allocation7], 4
      %s765 = int_to_ptr.vmem [resolvable:$true] %s764
      %767 = dma.vmem_to_hbm [thread:$0]  %s765, 256, %s4, [#allocation4]
    $region29: #{tpu_custom_call.1} parent=1 // pred_fallthru
      _
    // Predicated region
    $region30: #{tpu_custom_call.1} parent=1 // pred_check
      _
    $region31: #{tpu_custom_call.1} parent=1 // pred_check_branch
      %769 = sbr.rel (0) target = $region33
    $region32: #{tpu_custom_call.1} parent=1 // pred_region
      %770 = dma.done [#allocation4], 256
    $region33: #{tpu_custom_call.1} parent=1 // pred_fallthru
      _
    %771 = vsyncpa [#allocation3], 1
    %772 = vsyncpa [#allocation6], 1
    %773 = vsyncpa [#allocation4], 1

</llo_original>
